<compile_context>
chip_gen: v5e
topology: v5e:2x2
jax: 0.10.0
libtpu: 0.0.40
codegen_flags: <defaults>
</compile_context>

<pallas_src>
import functools

import jax
import jax.numpy as jnp
from jax.experimental import pallas as pl
from jax.experimental.pallas import tpu as pltpu


def _pick_hw_tile(hw: int, c: int, itemsize: int,
                  target_bytes: int = 2 * 1024 * 1024) -> int:
    """Largest spatial tile that divides hw, is a multiple of 128 when possible,
    and keeps one (c, hw_tile) block around ~target_bytes (VMEM headroom with
    double-buffering on v5e/v6e/v7x)."""
    if hw % 128 != 0:
        # Only reachable for small hw (<= 128): use the full extent (legal block).
        return hw
    max_tile = max(128, (target_bytes // max(1, c * itemsize)) // 128 * 128)
    if hw <= max_tile:
        return hw
    best = 128
    t = 128
    while t <= max_tile:
        if hw % t == 0:
            best = t
        t += 128
    return best


def _squeeze_excite_kernel(x_ref, w1_ref, w2_ref, gate_ref, acc_ref, *,
                           inv_hw, hw_tile):
    # x_ref   : (1, c, hw_tile)  one batch element, one spatial tile
    # w1_ref  : (cr, c)          fc1 weight (resident; constant block index)
    # w2_ref  : (c, cr)          fc2 weight (resident; constant block index)
    # gate_ref: (1, c, 1)        per-batch sigmoid gate (written at last tile)
    # acc_ref : (c, 128) f32     lane-dense spatial-sum accumulator
    j = pl.program_id(1)

    @pl.when(j == 0)
    def _():
        acc_ref[...] = jnp.zeros_like(acc_ref)

    if hw_tile % 128 == 0:
        # Lane-dense partial sums: slice 128-lane chunks straight off the ref
        # (no big vreg materialization) and accumulate with VPU adds only.
        for k in range(hw_tile // 128):
            acc_ref[...] += x_ref[0, :, k * 128:(k + 1) * 128].astype(jnp.float32)
    else:
        # Small / odd spatial extent: per-step lane reduce into lane 0.
        acc_ref[:, 0:1] += jnp.sum(x_ref[0].astype(jnp.float32), axis=-1,
                                   keepdims=True)

    @pl.when(j == pl.num_programs(1) - 1)
    def _():
        if hw_tile % 128 == 0:
            pooled = jnp.sum(acc_ref[...], axis=-1, keepdims=True) * inv_hw
        else:
            pooled = acc_ref[:, 0:1] * inv_hw                            # (c, 1)
        h = jnp.dot(w1_ref[...].astype(jnp.float32), pooled,
                    preferred_element_type=jnp.float32)                  # (cr, 1)
        h = jnp.maximum(h, 0.0)
        g = jnp.dot(w2_ref[...].astype(jnp.float32), h,
                    preferred_element_type=jnp.float32)                  # (c, 1)
        gate_ref[0] = jax.nn.sigmoid(g).astype(gate_ref.dtype)


def _broadcast_kernel(gate_ref, o_ref):
    # gate_ref: (1, c, 1) f32;  o_ref: (1, c, hw_tile)
    g = gate_ref[0]                                                      # (c, 1)
    o_ref[0] = jnp.broadcast_to(g, o_ref.shape[1:]).astype(o_ref.dtype)


@jax.jit
def se_attention(x, w1, w2):
    """x: (b, c, h, w) NCHW; w1: (c//r, c); w2: (c, c//r). Returns broadcast gate (b, c, h, w)."""
    b, c, hh, ww = x.shape
    cr = w1.shape[0]
    hw = hh * ww
    x2 = x.reshape(b, c, hw)

    # Pad the spatial axis to a lane multiple so every tile/store is lane-dense.
    # Zero padding does not change the spatial sum; the mean divides by true hw.
    hw_pad = hw if (hw % 128 == 0 or hw <= 128) else ((hw + 127) // 128) * 128
    if hw_pad != hw:
        x2 = jnp.pad(x2, ((0, 0), (0, 0), (0, hw_pad - hw)))

    hw_tile = _pick_hw_tile(hw_pad, c, x.dtype.itemsize)
    n_hw = hw_pad // hw_tile

    # ---- Phase 1: squeeze (pool) + excite (FC1/ReLU/FC2/sigmoid) -> compact gate.
    gate = pl.pallas_call(
        functools.partial(_squeeze_excite_kernel, inv_hw=1.0 / hw, hw_tile=hw_tile),
        out_shape=jax.ShapeDtypeStruct((b, c, 1), jnp.float32),
        grid_spec=pltpu.PrefetchScalarGridSpec(
            num_scalar_prefetch=0,
            grid=(b, n_hw),
            in_specs=[
                pl.BlockSpec((1, c, hw_tile), lambda i, j: (i, 0, j)),
                pl.BlockSpec((cr, c), lambda i, j: (0, 0)),
                pl.BlockSpec((c, cr), lambda i, j: (0, 0)),
            ],
            out_specs=pl.BlockSpec((1, c, 1), lambda i, j: (i, 0, 0)),
            scratch_shapes=[pltpu.VMEM((c, 128), jnp.float32)],
        ),
        compiler_params=pltpu.CompilerParams(
            dimension_semantics=("parallel", "arbitrary")),
    )(x2, w1, w2)

    # ---- Phase 2: pure streaming broadcast of the gate over the spatial dims.
    out = pl.pallas_call(
        _broadcast_kernel,
        out_shape=jax.ShapeDtypeStruct((b, c, hw_pad), x.dtype),
        grid_spec=pltpu.PrefetchScalarGridSpec(
            num_scalar_prefetch=0,
            grid=(b, n_hw),
            in_specs=[pl.BlockSpec((1, c, 1), lambda i, j: (i, 0, 0))],
            out_specs=pl.BlockSpec((1, c, hw_tile), lambda i, j: (i, 0, j)),
        ),
        compiler_params=pltpu.CompilerParams(
            dimension_semantics=("parallel", "parallel")),
    )(gate)

    if hw_pad != hw:
        out = out[:, :, :hw]
    return out.reshape(b, c, hh, ww)


def reference_se_attention(x, w1, w2):
    """Pure-JAX reference matching the PyTorch forward (returns the broadcast gate)."""
    p = jnp.mean(x, axis=(2, 3))                                         # (b, c)
    h = jnp.maximum(p @ w1.T, 0.0)                                       # (b, c//r)
    y = jax.nn.sigmoid(h @ w2.T)                                         # (b, c)
    return jnp.broadcast_to(y[:, :, None, None], x.shape)


if __name__ == "__main__":
    # Small forward-consistent shapes: batch=2, channel=128, reduction=4, spatial=16x16.
    B, C, H, W = 2, 128, 16, 16
    REDUCTION = 4
    CR = C // REDUCTION

    key = jax.random.PRNGKey(0)
    kx, k1, k2 = jax.random.split(key, 3)

    x = jax.random.normal(kx, (B, C, H, W), dtype=jnp.float32)
    # Weight scale larger than the module's init std (0.001) so the sigmoid gate
    # actually varies and the numerical check is meaningful.
    w1 = jax.random.normal(k1, (CR, C), dtype=jnp.float32) * 0.5
    w2 = jax.random.normal(k2, (C, CR), dtype=jnp.float32) * 0.5

    out = jax.block_until_ready(se_attention(x, w1, w2))
    ref = reference_se_attention(x, w1, w2)

    assert out.shape == (B, C, H, W)
    assert jnp.allclose(out, ref, atol=1e-5, rtol=1e-5)

    print("KERNEL_OK")
</pallas_src>

<mosaic_0001>
module attributes {stable_mosaic.version = 11 : i64} {
  func.func @_squeeze_excite_kernel(%arg0: i32, %arg1: i32, %arg2: memref<1x128x256xf32, #tpu.memory_space<vmem>>, %arg3: memref<32x128xf32, #tpu.memory_space<vmem>>, %arg4: memref<128x32xf32, #tpu.memory_space<vmem>>, %arg5: memref<1x128x1xf32, #tpu.memory_space<vmem>>, %arg6: memref<128x128xf32, #tpu.memory_space<vmem>>) attributes {dimension_semantics = [#tpu.dimension_semantics<parallel>, #tpu.dimension_semantics<arbitrary>], iteration_bounds = array<i64: 2, 1>, scalar_prefetch = 0 : i64, scratch_operands = 1 : i64, tpu.core_type = #tpu.core_type<tc>, window_params = [{transform_indices = @transform_0, window_bounds = array<i64: 1, 128, 256>}, {pipeline_mode = #tpu.pipeline_mode<synchronous>, transform_indices = @transform_1, window_bounds = array<i64: 32, 128>}, {pipeline_mode = #tpu.pipeline_mode<synchronous>, transform_indices = @transform_2, window_bounds = array<i64: 128, 32>}, {transform_indices = @transform_3, window_bounds = array<i64: 1, 128, 1>}]} {
    %c0_i32 = arith.constant 0 : i32
    %0 = arith.cmpi eq, %arg1, %c0_i32 : i32
    %1 = arith.extui %0 : i1 to i32
    %c0_i32_0 = arith.constant 0 : i32
    %2 = arith.cmpi ne, %1, %c0_i32_0 : i32
    scf.if %2 {
      %cst = arith.constant 0.000000e+00 : f32
      %16 = vector.broadcast %cst : f32 to vector<128x128xf32>
      %c0_15 = arith.constant 0 : index
      %c0_16 = arith.constant 0 : index
      %17 = vector.load %arg6[%c0_15, %c0_16] : memref<128x128xf32, #tpu.memory_space<vmem>>, vector<128x128xf32>
      tpu.vector_store %arg6[%c0_15, %c0_16], %16 {strides = array<i32>} : memref<128x128xf32, #tpu.memory_space<vmem>>, vector<128x128xf32>,
    } else {
    }
    %c0 = arith.constant 0 : index
    %c0_1 = arith.constant 0 : index
    %3 = vector.load %arg6[%c0, %c0_1] : memref<128x128xf32, #tpu.memory_space<vmem>>, vector<128x128xf32>
    %c0_2 = arith.constant 0 : index
    %c0_3 = arith.constant 0 : index
    %c0_4 = arith.constant 0 : index
    %4 = vector.load %arg2[%c0_2, %c0_3, %c0_4] : memref<1x128x256xf32, #tpu.memory_space<vmem>>, vector<1x128x128xf32>
    %5 = vector.shape_cast %4 : vector<1x128x128xf32> to vector<128x128xf32>
    %6 = arith.addf %3, %5 : vector<128x128xf32>
    %c0_5 = arith.constant 0 : index
    %c0_6 = arith.constant 0 : index
    %7 = vector.load %arg6[%c0_5, %c0_6] : memref<128x128xf32, #tpu.memory_space<vmem>>, vector<128x128xf32>
    tpu.vector_store %arg6[%c0_5, %c0_6], %6 {strides = array<i32>} : memref<128x128xf32, #tpu.memory_space<vmem>>, vector<128x128xf32>,
    %c0_7 = arith.constant 0 : index
    %c0_8 = arith.constant 0 : index
    %8 = vector.load %arg6[%c0_7, %c0_8] : memref<128x128xf32, #tpu.memory_space<vmem>>, vector<128x128xf32>
    %c0_9 = arith.constant 0 : index
    %c0_10 = arith.constant 0 : index
    %c128 = arith.constant 128 : index
    %9 = vector.load %arg2[%c0_9, %c0_10, %c128] : memref<1x128x256xf32, #tpu.memory_space<vmem>>, vector<1x128x128xf32>
    %10 = vector.shape_cast %9 : vector<1x128x128xf32> to vector<128x128xf32>
    %11 = arith.addf %8, %10 : vector<128x128xf32>
    %c0_11 = arith.constant 0 : index
    %c0_12 = arith.constant 0 : index
    %12 = vector.load %arg6[%c0_11, %c0_12] : memref<128x128xf32, #tpu.memory_space<vmem>>, vector<128x128xf32>
    tpu.vector_store %arg6[%c0_11, %c0_12], %11 {strides = array<i32>} : memref<128x128xf32, #tpu.memory_space<vmem>>, vector<128x128xf32>,
    %c0_i32_13 = arith.constant 0 : i32
    %13 = arith.cmpi eq, %arg1, %c0_i32_13 : i32
    %14 = arith.extui %13 : i1 to i32
    %c0_i32_14 = arith.constant 0 : i32
    %15 = arith.cmpi ne, %14, %c0_i32_14 : i32
    scf.if %15 {
      %c0_15 = arith.constant 0 : index
      %c0_16 = arith.constant 0 : index
      %16 = vector.load %arg6[%c0_15, %c0_16] : memref<128x128xf32, #tpu.memory_space<vmem>>, vector<128x128xf32>
      %cst = arith.constant dense<0.000000e+00> : vector<128xf32>
      %17 = vector.multi_reduction <add>, %16, %cst [1] : vector<128x128xf32> to vector<128xf32>
      %18 = vector.shape_cast %17 : vector<128xf32> to vector<128x1xf32>
      %cst_17 = arith.constant 3.906250e-03 : f32
      %19 = vector.broadcast %cst_17 : f32 to vector<128x1xf32>
      %20 = arith.mulf %18, %19 : vector<128x1xf32>
      %c0_18 = arith.constant 0 : index
      %c0_19 = arith.constant 0 : index
      %21 = vector.load %arg3[%c0_18, %c0_19] : memref<32x128xf32, #tpu.memory_space<vmem>>, vector<32x128xf32>
      %cst_20 = arith.constant dense<0.000000e+00> : vector<32x1xf32>
      %22 = tpu.matmul %21, %20, %cst_20 {dimension_numbers = #tpu.dot_dimension_numbers<[1], [0], [0], [1], [0, 0, 1, 1], [], []>} : vector<32x128xf32>, vector<128x1xf32>, vector<32x1xf32> -> vector<32x1xf32>
      %cst_21 = arith.constant 0.000000e+00 : f32
      %23 = vector.broadcast %cst_21 : f32 to vector<32x1xf32>
      %24 = arith.maximumf %22, %23 : vector<32x1xf32>
      %c0_22 = arith.constant 0 : index
      %c0_23 = arith.constant 0 : index
      %25 = vector.load %arg4[%c0_22, %c0_23] : memref<128x32xf32, #tpu.memory_space<vmem>>, vector<128x32xf32>
      %cst_24 = arith.constant dense<0.000000e+00> : vector<128x1xf32>
      %26 = tpu.matmul %25, %24, %cst_24 {dimension_numbers = #tpu.dot_dimension_numbers<[1], [0], [0], [1], [0, 0, 1, 1], [], []>} : vector<128x32xf32>, vector<32x1xf32>, vector<128x1xf32> -> vector<128x1xf32>
      %27 = arith.negf %26 : vector<128x1xf32>
      %28 = math.exp %27 : vector<128x1xf32>
      %cst_25 = arith.constant 1.000000e+00 : f32
      %29 = vector.broadcast %cst_25 : f32 to vector<128x1xf32>
      %30 = arith.addf %29, %28 : vector<128x1xf32>
      %31 = arith.divf %29, %30 : vector<128x1xf32>
      %c0_26 = arith.constant 0 : index
      %c0_27 = arith.constant 0 : index
      %c0_28 = arith.constant 0 : index
      %32 = vector.load %arg5[%c0_26, %c0_27, %c0_28] : memref<1x128x1xf32, #tpu.memory_space<vmem>>, vector<1x128x1xf32>
      %33 = vector.shape_cast %32 : vector<1x128x1xf32> to vector<128x1xf32>
      %34 = vector.shape_cast %31 : vector<128x1xf32> to vector<1x128x1xf32>
      tpu.vector_store %arg5[%c0_26, %c0_27, %c0_28], %34 {strides = array<i32>} : memref<1x128x1xf32, #tpu.memory_space<vmem>>, vector<1x128x1xf32>,
    } else {
    }
    return
  }
  func.func @transform_0(%arg0: i32, %arg1: i32) -> (i32, i32, i32) {
    %c0_i32 = arith.constant 0 : i32
    %c0_i32_0 = arith.constant 0 : i32
    return %arg0, %c0_i32, %arg1 : i32, i32, i32
  }
  func.func @transform_1(%arg0: i32, %arg1: i32) -> (i32, i32) {
    %c0_i32 = arith.constant 0 : i32
    %c0_i32_0 = arith.constant 0 : i32
    %c0_i32_1 = arith.constant 0 : i32
    return %c0_i32, %c0_i32_0 : i32, i32
  }
  func.func @transform_2(%arg0: i32, %arg1: i32) -> (i32, i32) {
    %c0_i32 = arith.constant 0 : i32
    %c0_i32_0 = arith.constant 0 : i32
    %c0_i32_1 = arith.constant 0 : i32
    return %c0_i32, %c0_i32_0 : i32, i32
  }
  func.func @transform_3(%arg0: i32, %arg1: i32) -> (i32, i32, i32) {
    %c0_i32 = arith.constant 0 : i32
    %c0_i32_0 = arith.constant 0 : i32
    %c0_i32_1 = arith.constant 0 : i32
    return %arg0, %c0_i32, %c0_i32_0 : i32, i32, i32
  }
}

module attributes {stable_mosaic.version = 11 : i64} {
  func.func @_broadcast_kernel(%arg0: i32, %arg1: i32, %arg2: memref<1x128x1xf32, #tpu.memory_space<vmem>>, %arg3: memref<1x128x256xf32, #tpu.memory_space<vmem>>) attributes {dimension_semantics = [#tpu.dimension_semantics<parallel>, #tpu.dimension_semantics<parallel>], iteration_bounds = array<i64: 2, 1>, scalar_prefetch = 0 : i64, scratch_operands = 0 : i64, tpu.core_type = #tpu.core_type<tc>, window_params = [{transform_indices = @transform_0, window_bounds = array<i64: 1, 128, 1>}, {transform_indices = @transform_1, window_bounds = array<i64: 1, 128, 256>}]} {
    %c0 = arith.constant 0 : index
    %c0_0 = arith.constant 0 : index
    %c0_1 = arith.constant 0 : index
    %0 = vector.load %arg2[%c0, %c0_0, %c0_1] : memref<1x128x1xf32, #tpu.memory_space<vmem>>, vector<1x128x1xf32>
    %1 = vector.shape_cast %0 : vector<1x128x1xf32> to vector<128x1xf32>
    %2 = vector.shape_cast %1 : vector<128x1xf32> to vector<128x1xf32>
    %3 = vector.broadcast %2 : vector<128x1xf32> to vector<128x256xf32>
    %c0_2 = arith.constant 0 : index
    %c0_3 = arith.constant 0 : index
    %c0_4 = arith.constant 0 : index
    %4 = vector.load %arg3[%c0_2, %c0_3, %c0_4] : memref<1x128x256xf32, #tpu.memory_space<vmem>>, vector<1x128x256xf32>
    %5 = vector.shape_cast %4 : vector<1x128x256xf32> to vector<128x256xf32>
    %6 = vector.shape_cast %3 : vector<128x256xf32> to vector<1x128x256xf32>
    tpu.vector_store %arg3[%c0_2, %c0_3, %c0_4], %6 {strides = array<i32>} : memref<1x128x256xf32, #tpu.memory_space<vmem>>, vector<1x128x256xf32>,
    return
  }
  func.func @transform_0(%arg0: i32, %arg1: i32) -> (i32, i32, i32) {
    %c0_i32 = arith.constant 0 : i32
    %c0_i32_0 = arith.constant 0 : i32
    %c0_i32_1 = arith.constant 0 : i32
    return %arg0, %c0_i32, %c0_i32_0 : i32, i32, i32
  }
  func.func @transform_1(%arg0: i32, %arg1: i32) -> (i32, i32, i32) {
    %c0_i32 = arith.constant 0 : i32
    %c0_i32_0 = arith.constant 0 : i32
    return %arg0, %c0_i32, %arg1 : i32, i32, i32
  }
}

</mosaic_0001>

<llo_original>
// kernel: se_attention.3
$region0: #{se_attention.3}
  #allocation0 [shape = 'u32[]', space=smem, size = 0x4, offset = 0x4, fixed_abs, tag = 'smem constant byte address 0x4 - core index']
  #allocation1 [shape = 'u32[72,128]{1,0:T(1,128)}', space=vmem, size = 0x9000, scoped, tag = 'internal scratch']
  %s0 = inlined_call_operand.vmem [shape: f32[2,128,1], index: 0, kind: input, shape index: {}]
  %s1 = inlined_call_operand.vmem [shape: f32[2,128,256], index: 1, kind: output, shape index: {}]
  %s2 = sld [smem:[#allocation0]]
  $region37: #{se_attention.3} parent=0
    _
  %s4 = ssub.s32 1, %s2
  %s5 = scalar_select 0, %s4, %s2
  loop: start=0, step=1, limit=4
  $region2: #{se_attention.3} parent=0 // loop_pre_header
    _
  $region3: #{se_attention.3} parent=0 // loop_header
    %s7 = sphi 0, %s11
    %p8 = scmp.ge.s32.totalorder %s7, 4
    %s14 = sphi 0, %s26
    %s15 = sphi 0, %s22
    %s16 = sphi 0, %s14
    %s17 = sphi 0, %s15
    %s18 = sphi 0, %s16
    %s19 = sphi 0, %s17
    %s29 = sphi 0, %s31
    %s32 = sphi 0, %s29
    %s33 = sphi 0, %s32
    %s49 = sphi 0, %s33
    %s57 = sphi 0, %s59
    %s60 = sphi 0, %s57
    %s61 = sphi 0, %s60
    %s77 = sphi 0, %s61
  $region4: #{se_attention.3} parent=0 // loop_header_branch
    %10 = sbr.rel (%p8) target = $region8
  $region5: #{se_attention.3} parent=0 // loop_body
    %s12 = ssub.s32 %s7, 1
    %s13 = ssub.s32 %s7, 2
    %s20 = sadd.s32 1, %s15
    %p21 = scmp.ge.s32.totalorder %s20, 1
    %s22 = scalar_select %p21, 0, %s20
    %s23 = sadd.s32 1, %s14
    %s24 = scalar_select %p21, %s23, %s14
    %p25 = scmp.ge.s32.totalorder %s24, 2
    %s26 = scalar_select %p25, 0, %s24
    %s27 = ssub.s32 %s14, %s26
    %p28 = scmp.eq.s32.totalorder %s27, 0
    %s30 = sadd.s32 %s29, 1
    %s31 = scalar_select %p28, %s29, %s30
    %p34 = pneg %p28
    %p35 = scmp.eq.s32.totalorder %s7, 1
    %p36 = por %p34, %p35
    %p37 = scmp.ne.s32.totalorder %s29, %s32
    %p38 = scmp.eq.s32.totalorder %s7, 0
    %p39 = por %p37, %p38
    %p40 = scmp.ne.s32.totalorder %s29, %s32
    %p41 = scmp.eq.s32.totalorder %s12, 1
    %p42 = por %p40, %p41
    %p43 = scmp.ne.s32.totalorder %s32, %s33
    %p44 = scmp.eq.s32.totalorder %s12, 0
    %p45 = por %p43, %p44
    %p46 = scmp.ne.s32.totalorder %s32, %s33
    %p47 = scmp.eq.s32.totalorder %s13, 1
    %p48 = por %p46, %p47
    %p50 = scmp.ne.s32.totalorder %s33, %s49
    %p51 = scmp.eq.s32.totalorder %s13, 0
    %p52 = por %p50, %p51
    %s53 = ssub.s32 %s14, %s26
    %s54 = ssub.s32 %s15, %s22
    %s55 = sor.u32 %s53, %s54
    %p56 = scmp.eq.s32.totalorder %s55, 0
    %s58 = sadd.s32 %s57, 1
    %s59 = scalar_select %p56, %s57, %s58
    %p62 = pneg %p56
    %p63 = scmp.eq.s32.totalorder %s7, 1
    %p64 = por %p62, %p63
    %p65 = scmp.ne.s32.totalorder %s57, %s60
    %p66 = scmp.eq.s32.totalorder %s7, 0
    %p67 = por %p65, %p66
    %p68 = scmp.ne.s32.totalorder %s57, %s60
    %p69 = scmp.eq.s32.totalorder %s12, 1
    %p70 = por %p68, %p69
    %p71 = scmp.ne.s32.totalorder %s60, %s61
    %p72 = scmp.eq.s32.totalorder %s12, 0
    %p73 = por %p71, %p72
    %p74 = scmp.ne.s32.totalorder %s60, %s61
    %p75 = scmp.eq.s32.totalorder %s13, 1
    %p76 = por %p74, %p75
    %p78 = scmp.ne.s32.totalorder %s61, %s77
    %p79 = scmp.eq.s32.totalorder %s13, 0
    %p80 = por %p78, %p79
    %p81 = scmp.le.s32.totalorder 1, %s7
    %p82 = scmp.lt.s32.totalorder %s7, 3
    %p83 = pnand %p81, %p82
    %p84 = pneg %p83
    // Predicated region
    $region9: #{se_attention.3} parent=5 // pred_check
      _
    $region10: #{se_attention.3} parent=5 // pred_check_branch
      %86 = sbr.rel (%p83) target = $region12
    $region11: #{se_attention.3} parent=5 // pred_region
      %s87 = ssub.s32 %s7, 1
    $region12: #{se_attention.3} parent=5 // pred_fallthru
      _
    %p88 = scmp.lt.s32.totalorder %s7, 2
    // Predicated region
    $region13: #{se_attention.3} parent=5 // pred_check
      %p89 = pneg %p88
    $region14: #{se_attention.3} parent=5 // pred_check_branch
      %91 = sbr.rel (%p89) target = $region16
    $region15: #{se_attention.3} parent=5 // pred_region
      // Predicated region
      $region17: #{se_attention.3} parent=15 // pred_check
        %p92 = pneg %p39
      $region18: #{se_attention.3} parent=15 // pred_check_branch
        %94 = sbr.rel (%p92) target = $region20
      $region19: #{se_attention.3} parent=15 // pred_region
        %p95 = scmp.lt.s32.totalorder %s14, 1
        %s96 = scalar_select %p95, %s14, 1
        %s97 = smul.addr %s96, 16
        %s98 = smul.addr %s97, 8
        %s99 = scalar_lea.vmem %s0, %s98
      $region20: #{se_attention.3} parent=15 // pred_fallthru
        _
    $region16: #{se_attention.3} parent=5 // pred_fallthru
      _
    %p100 = scmp.le.s32.totalorder 1, %s7
    %p101 = scmp.lt.s32.totalorder %s7, 3
    %p102 = pnand %p100, %p101
    %p103 = pneg %p102
    // Predicated region
    $region21: #{se_attention.3} parent=5 // pred_check
      _
    $region22: #{se_attention.3} parent=5 // pred_check_branch
      %105 = sbr.rel (%p102) target = $region24
    $region23: #{se_attention.3} parent=5 // pred_region
      %s106 = ssub.s32 %s7, 1
      %p107 = scmp.lt.s32.totalorder %s16, 1
      %s108 = scalar_select %p107, %s16, 1
      %s109 = smul.addr %s108, 16
      %s110 = smul.addr %s109, 8
      %s111 = scalar_lea.vmem %s0, %s110
      %p112 = pneg %p45
      %p113 = pneg %p42
      %p114 = pneg %p73
      %p115 = pneg %p70
      %s116 = smul.u32 2, %s17
      %p117 = scmp.lt.s32.totalorder %s16, 1
      %s118 = scalar_select %p117, %s16, 1
      %p119 = scmp.lt.s32.totalorder %s116, 1
      %s120 = scalar_select %p119, %s116, 1
      %s121 = smul.addr %s118, 32
      %s122 = sadd.s32 %s120, %s121
      %s123 = smul.addr %s122, 8
      %s124 = scalar_lea.vmem %s1, %s123
      %p125 = scmp.lt.s32.totalorder %s16, 1
      %s126 = scalar_select %p125, %s16, 1
      %s127 = smul.addr %s126, 16
      %s128 = smul.addr %s127, 8
      %s129 = scalar_lea.vmem %s0, %s128
      %s130 = smul.u32 2, %s17
      %p131 = scmp.lt.s32.totalorder %s16, 1
      %s132 = scalar_select %p131, %s16, 1
      %p133 = scmp.lt.s32.totalorder %s130, 1
      %s134 = scalar_select %p133, %s130, 1
      %s135 = smul.addr %s132, 32
      %s136 = sadd.s32 %s134, %s135
      %s137 = smul.addr %s136, 8
      %s138 = scalar_lea.vmem %s1, %s137
      %s139 = smul.u32 2, %s17
      %v140 = vld [vmem:[%s129] sm:$0xff]
      %v141 = vld [vmem:[%s129 + $0x8] sm:$0xff]
      %v142 = vld [vmem:[%s129 + $0x10] sm:$0xff]
      %v143 = vld [vmem:[%s129 + $0x18] sm:$0xff]
      %v144 = vld [vmem:[%s129 + $0x20] sm:$0xff]
      %v145 = vld [vmem:[%s129 + $0x28] sm:$0xff]
      %v146 = vld [vmem:[%s129 + $0x30] sm:$0xff]
      %v147 = vld [vmem:[%s129 + $0x38] sm:$0xff]
      %v148 = vld [vmem:[%s129 + $0x40] sm:$0xff]
      %v149 = vld [vmem:[%s129 + $0x48] sm:$0xff]
      %v150 = vld [vmem:[%s129 + $0x50] sm:$0xff]
      %v151 = vld [vmem:[%s129 + $0x58] sm:$0xff]
      %v152 = vld [vmem:[%s129 + $0x60] sm:$0xff]
      %v153 = vld [vmem:[%s129 + $0x68] sm:$0xff]
      %v154 = vld [vmem:[%s129 + $0x70] sm:$0xff]
      %v155 = vld [vmem:[%s129 + $0x78] sm:$0xff]
      %157 = vset.pattern.permute.xlu0 0
      %158 = vperm.xlu0 %157, %v140
      %v159 = vpop.permute.xlu0 %158
      %162 = vset.pattern.permute.xlu0 0
      %163 = vperm.xlu0 %162, %v141
      %v164 = vpop.permute.xlu0 %163
      %167 = vset.pattern.permute.xlu0 0
      %168 = vperm.xlu0 %167, %v142
      %v169 = vpop.permute.xlu0 %168
      %172 = vset.pattern.permute.xlu0 0
      %173 = vperm.xlu0 %172, %v143
      %v174 = vpop.permute.xlu0 %173
      %177 = vset.pattern.permute.xlu0 0
      %178 = vperm.xlu0 %177, %v144
      %v179 = vpop.permute.xlu0 %178
      %182 = vset.pattern.permute.xlu0 0
      %183 = vperm.xlu0 %182, %v145
      %v184 = vpop.permute.xlu0 %183
      %187 = vset.pattern.permute.xlu0 0
      %188 = vperm.xlu0 %187, %v146
      %v189 = vpop.permute.xlu0 %188
      %192 = vset.pattern.permute.xlu0 0
      %193 = vperm.xlu0 %192, %v147
      %v194 = vpop.permute.xlu0 %193
      %197 = vset.pattern.permute.xlu0 0
      %198 = vperm.xlu0 %197, %v148
      %v199 = vpop.permute.xlu0 %198
      %202 = vset.pattern.permute.xlu0 0
      %203 = vperm.xlu0 %202, %v149
      %v204 = vpop.permute.xlu0 %203
      %207 = vset.pattern.permute.xlu0 0
      %208 = vperm.xlu0 %207, %v150
      %v209 = vpop.permute.xlu0 %208
      %212 = vset.pattern.permute.xlu0 0
      %213 = vperm.xlu0 %212, %v151
      %v214 = vpop.permute.xlu0 %213
      %217 = vset.pattern.permute.xlu0 0
      %218 = vperm.xlu0 %217, %v152
      %v219 = vpop.permute.xlu0 %218
      %222 = vset.pattern.permute.xlu0 0
      %223 = vperm.xlu0 %222, %v153
      %v224 = vpop.permute.xlu0 %223
      %227 = vset.pattern.permute.xlu0 0
      %228 = vperm.xlu0 %227, %v154
      %v229 = vpop.permute.xlu0 %228
      %232 = vset.pattern.permute.xlu0 0
      %233 = vperm.xlu0 %232, %v155
      %v234 = vpop.permute.xlu0 %233
      %236 = vst [vmem:[%s138] sm:$0xff] %v159
      %237 = vst [vmem:[%s138 + $0x8] sm:$0xff] %v159
      %238 = vst [vmem:[%s138 + $0x10] sm:$0xff] %v164
      %239 = vst [vmem:[%s138 + $0x18] sm:$0xff] %v164
      %240 = vst [vmem:[%s138 + $0x20] sm:$0xff] %v169
      %241 = vst [vmem:[%s138 + $0x28] sm:$0xff] %v169
      %242 = vst [vmem:[%s138 + $0x30] sm:$0xff] %v174
      %243 = vst [vmem:[%s138 + $0x38] sm:$0xff] %v174
      %244 = vst [vmem:[%s138 + $0x40] sm:$0xff] %v179
      %245 = vst [vmem:[%s138 + $0x48] sm:$0xff] %v179
      %246 = vst [vmem:[%s138 + $0x50] sm:$0xff] %v184
      %247 = vst [vmem:[%s138 + $0x58] sm:$0xff] %v184
      %248 = vst [vmem:[%s138 + $0x60] sm:$0xff] %v189
      %249 = vst [vmem:[%s138 + $0x68] sm:$0xff] %v189
      %250 = vst [vmem:[%s138 + $0x70] sm:$0xff] %v194
      %251 = vst [vmem:[%s138 + $0x78] sm:$0xff] %v194
      %252 = vst [vmem:[%s138 + $0x80] sm:$0xff] %v199
      %253 = vst [vmem:[%s138 + $0x88] sm:$0xff] %v199
      %254 = vst [vmem:[%s138 + $0x90] sm:$0xff] %v204
      %255 = vst [vmem:[%s138 + $0x98] sm:$0xff] %v204
      %256 = vst [vmem:[%s138 + $0xa0] sm:$0xff] %v209
      %257 = vst [vmem:[%s138 + $0xa8] sm:$0xff] %v209
      %258 = vst [vmem:[%s138 + $0xb0] sm:$0xff] %v214
      %259 = vst [vmem:[%s138 + $0xb8] sm:$0xff] %v214
      %260 = vst [vmem:[%s138 + $0xc0] sm:$0xff] %v219
      %261 = vst [vmem:[%s138 + $0xc8] sm:$0xff] %v219
      %262 = vst [vmem:[%s138 + $0xd0] sm:$0xff] %v224
      %263 = vst [vmem:[%s138 + $0xd8] sm:$0xff] %v224
      %264 = vst [vmem:[%s138 + $0xe0] sm:$0xff] %v229
      %265 = vst [vmem:[%s138 + $0xe8] sm:$0xff] %v229
      %266 = vst [vmem:[%s138 + $0xf0] sm:$0xff] %v234
      %267 = vst [vmem:[%s138 + $0xf8] sm:$0xff] %v234
      %s268 = smul.u32 2, %s17
      %p269 = scmp.lt.s32.totalorder %s16, 1
      %s270 = scalar_select %p269, %s16, 1
      %p271 = scmp.lt.s32.totalorder %s268, 1
      %s272 = scalar_select %p271, %s268, 1
      %s273 = smul.addr %s270, 32
      %s274 = sadd.s32 %s272, %s273
      %s275 = smul.addr %s274, 8
      %s276 = scalar_lea.vmem %s1, %s275
      // Predicated region
      $region25: #{se_attention.3} parent=23 // pred_check
        %p277 = pneg %p70
      $region26: #{se_attention.3} parent=23 // pred_check_branch
        %279 = sbr.rel (%p277) target = $region28
      $region27: #{se_attention.3} parent=23 // pred_region
        %s280 = smul.u32 2, %s17
      $region28: #{se_attention.3} parent=23 // pred_fallthru
        _
    $region24: #{se_attention.3} parent=5 // pred_fallthru
      _
    %p281 = scmp.le.s32.totalorder 2, %s7
    // Predicated region
    $region29: #{se_attention.3} parent=5 // pred_check
      %p282 = pneg %p281
    $region30: #{se_attention.3} parent=5 // pred_check_branch
      %284 = sbr.rel (%p282) target = $region32
    $region31: #{se_attention.3} parent=5 // pred_region
      %s285 = ssub.s32 %s7, 2
      // Predicated region
      $region33: #{se_attention.3} parent=31 // pred_check
        %p286 = pneg %p76
      $region34: #{se_attention.3} parent=31 // pred_check_branch
        %288 = sbr.rel (%p286) target = $region36
      $region35: #{se_attention.3} parent=31 // pred_region
        %s289 = smul.u32 2, %s19
        %p290 = scmp.lt.s32.totalorder %s18, 1
        %s291 = scalar_select %p290, %s18, 1
        %p292 = scmp.lt.s32.totalorder %s289, 1
        %s293 = scalar_select %p292, %s289, 1
        %s294 = smul.addr %s291, 32
        %s295 = sadd.s32 %s293, %s294
        %s296 = smul.addr %s295, 8
        %s297 = scalar_lea.vmem %s1, %s296
      $region36: #{se_attention.3} parent=31 // pred_fallthru
        _
    $region32: #{se_attention.3} parent=5 // pred_fallthru
      _
  $region6: #{se_attention.3} parent=0 // loop_footer
    %s11 = sadd.s32 1, %s7
  $region7: #{se_attention.3} parent=0 // loop_footer_branch
    %6 = sbr.rel target = $region3
  $region8: #{se_attention.3} parent=0 // loop_exit
    _

// kernel: se_attention.2
$region0: #{se_attention.2}
  #allocation0 [shape = 'u32[]', space=smem, size = 0x4, offset = 0x4, fixed_abs, tag = 'smem constant byte address 0x4 - core index']
  #allocation1 [shape = 'u32[72,128]{1,0:T(1,128)}', space=vmem, size = 0x9000, scoped, tag = 'internal scratch']
  #allocation2 [shape = 'f32[128,128]{1,0:T(8,128)}', space=vmem, size = 0x10000, scoped, tag = 'scratch operand']
  %s0 = inlined_call_operand.vmem [shape: f32[2,128,256], index: 0, kind: input, shape index: {}]
  %s1 = inlined_call_operand.vmem [shape: f32[32,128], index: 1, kind: input, shape index: {}]
  %s2 = inlined_call_operand.vmem [shape: f32[128,32], index: 2, kind: input, shape index: {}]
  %s3 = inlined_call_operand.vmem [shape: f32[2,128,1], index: 3, kind: output, shape index: {}]
  %s4 = sld [smem:[#allocation0]]
  $region53: #{se_attention.2} parent=0
    _
  %s6 = ssub.s32 1, %s4
  %s7 = scalar_select 0, %s6, %s4
  loop: start=0, step=1, limit=4
  $region2: #{se_attention.2} parent=0 // loop_pre_header
    _
  $region3: #{se_attention.2} parent=0 // loop_header
    %s9 = sphi 0, %s13
    %p10 = scmp.ge.s32.totalorder %s9, 4
    %s16 = sphi 0, %s28
    %s17 = sphi 0, %s24
    %s18 = sphi 0, %s16
    %s19 = sphi 0, %s17
    %s20 = sphi 0, %s18
    %s21 = sphi 0, %s19
    %s33 = sphi 0, %s35
    %s36 = sphi 0, %s33
    %s37 = sphi 0, %s36
    %s53 = sphi 0, %s37
    %s57 = sphi 0, %s57
    %s59 = sphi 0, %s57
    %s60 = sphi 0, %s59
    %s74 = sphi 0, %s60
    %s78 = sphi 0, %s78
    %s80 = sphi 0, %s78
    %s81 = sphi 0, %s80
    %s95 = sphi 0, %s81
    %s101 = sphi 0, %s103
    %s104 = sphi 0, %s101
    %s105 = sphi 0, %s104
    %s121 = sphi 0, %s105
  $region4: #{se_attention.2} parent=0 // loop_header_branch
    %12 = sbr.rel (%p10) target = $region8
  $region5: #{se_attention.2} parent=0 // loop_body
    %s14 = ssub.s32 %s9, 1
    %s15 = ssub.s32 %s9, 2
    %s22 = sadd.s32 1, %s17
    %p23 = scmp.ge.s32.totalorder %s22, 1
    %s24 = scalar_select %p23, 0, %s22
    %s25 = sadd.s32 1, %s16
    %s26 = scalar_select %p23, %s25, %s16
    %p27 = scmp.ge.s32.totalorder %s26, 2
    %s28 = scalar_select %p27, 0, %s26
    %s29 = ssub.s32 %s16, %s28
    %s30 = ssub.s32 %s17, %s24
    %s31 = sor.u32 %s29, %s30
    %p32 = scmp.eq.s32.totalorder %s31, 0
    %s34 = sadd.s32 %s33, 1
    %s35 = scalar_select %p32, %s33, %s34
    %p38 = pneg %p32
    %p39 = scmp.eq.s32.totalorder %s9, 1
    %p40 = por %p38, %p39
    %p41 = scmp.ne.s32.totalorder %s33, %s36
    %p42 = scmp.eq.s32.totalorder %s9, 0
    %p43 = por %p41, %p42
    %p44 = scmp.ne.s32.totalorder %s33, %s36
    %p45 = scmp.eq.s32.totalorder %s14, 1
    %p46 = por %p44, %p45
    %p47 = scmp.ne.s32.totalorder %s36, %s37
    %p48 = scmp.eq.s32.totalorder %s14, 0
    %p49 = por %p47, %p48
    %p50 = scmp.ne.s32.totalorder %s36, %s37
    %p51 = scmp.eq.s32.totalorder %s15, 1
    %p52 = por %p50, %p51
    %p54 = scmp.ne.s32.totalorder %s37, %s53
    %p55 = scmp.eq.s32.totalorder %s15, 0
    %p56 = por %p54, %p55
    %s58 = sadd.s32 %s57, 1
    %p61 = scmp.eq.s32.totalorder %s9, 1
    %p62 = scmp.ne.s32.totalorder %s57, %s59
    %p63 = scmp.eq.s32.totalorder %s9, 0
    %p64 = por %p62, %p63
    %p65 = scmp.ne.s32.totalorder %s57, %s59
    %p66 = scmp.eq.s32.totalorder %s14, 1
    %p67 = por %p65, %p66
    %p68 = scmp.ne.s32.totalorder %s59, %s60
    %p69 = scmp.eq.s32.totalorder %s14, 0
    %p70 = por %p68, %p69
    %p71 = scmp.ne.s32.totalorder %s59, %s60
    %p72 = scmp.eq.s32.totalorder %s15, 1
    %p73 = por %p71, %p72
    %p75 = scmp.ne.s32.totalorder %s60, %s74
    %p76 = scmp.eq.s32.totalorder %s15, 0
    %p77 = por %p75, %p76
    %s79 = sadd.s32 %s78, 1
    %p82 = scmp.eq.s32.totalorder %s9, 1
    %p83 = scmp.ne.s32.totalorder %s78, %s80
    %p84 = scmp.eq.s32.totalorder %s9, 0
    %p85 = por %p83, %p84
    %p86 = scmp.ne.s32.totalorder %s78, %s80
    %p87 = scmp.eq.s32.totalorder %s14, 1
    %p88 = por %p86, %p87
    %p89 = scmp.ne.s32.totalorder %s80, %s81
    %p90 = scmp.eq.s32.totalorder %s14, 0
    %p91 = por %p89, %p90
    %p92 = scmp.ne.s32.totalorder %s80, %s81
    %p93 = scmp.eq.s32.totalorder %s15, 1
    %p94 = por %p92, %p93
    %p96 = scmp.ne.s32.totalorder %s81, %s95
    %p97 = scmp.eq.s32.totalorder %s15, 0
    %p98 = por %p96, %p97
    %s99 = ssub.s32 %s16, %s28
    %p100 = scmp.eq.s32.totalorder %s99, 0
    %s102 = sadd.s32 %s101, 1
    %s103 = scalar_select %p100, %s101, %s102
    %p106 = pneg %p100
    %p107 = scmp.eq.s32.totalorder %s9, 1
    %p108 = por %p106, %p107
    %p109 = scmp.ne.s32.totalorder %s101, %s104
    %p110 = scmp.eq.s32.totalorder %s9, 0
    %p111 = por %p109, %p110
    %p112 = scmp.ne.s32.totalorder %s101, %s104
    %p113 = scmp.eq.s32.totalorder %s14, 1
    %p114 = por %p112, %p113
    %p115 = scmp.ne.s32.totalorder %s104, %s105
    %p116 = scmp.eq.s32.totalorder %s14, 0
    %p117 = por %p115, %p116
    %p118 = scmp.ne.s32.totalorder %s104, %s105
    %p119 = scmp.eq.s32.totalorder %s15, 1
    %p120 = por %p118, %p119
    %p122 = scmp.ne.s32.totalorder %s105, %s121
    %p123 = scmp.eq.s32.totalorder %s15, 0
    %p124 = por %p122, %p123
    %p125 = scmp.le.s32.totalorder 1, %s9
    %p126 = scmp.lt.s32.totalorder %s9, 3
    %p127 = pnand %p125, %p126
    %p128 = pneg %p127
    // Predicated region
    $region9: #{se_attention.2} parent=5 // pred_check
      _
    $region10: #{se_attention.2} parent=5 // pred_check_branch
      %130 = sbr.rel (%p127) target = $region12
    $region11: #{se_attention.2} parent=5 // pred_region
      %s131 = ssub.s32 %s9, 1
      // Predicated region
      $region13: #{se_attention.2} parent=11 // pred_check
        %p132 = pneg %p70
      $region14: #{se_attention.2} parent=11 // pred_check_branch
        %134 = sbr.rel (%p132) target = $region16
      $region15: #{se_attention.2} parent=11 // pred_region
        _
      $region16: #{se_attention.2} parent=11 // pred_fallthru
        _
      // Predicated region
      $region17: #{se_attention.2} parent=11 // pred_check
        %p135 = pneg %p91
      $region18: #{se_attention.2} parent=11 // pred_check_branch
        %137 = sbr.rel (%p135) target = $region20
      $region19: #{se_attention.2} parent=11 // pred_region
        _
      $region20: #{se_attention.2} parent=11 // pred_fallthru
        _
    $region12: #{se_attention.2} parent=5 // pred_fallthru
      _
    %p138 = scmp.lt.s32.totalorder %s9, 2
    // Predicated region
    $region21: #{se_attention.2} parent=5 // pred_check
      %p139 = pneg %p138
    $region22: #{se_attention.2} parent=5 // pred_check_branch
      %141 = sbr.rel (%p139) target = $region24
    $region23: #{se_attention.2} parent=5 // pred_region
      // Predicated region
      $region25: #{se_attention.2} parent=23 // pred_check
        %p142 = pneg %p43
      $region26: #{se_attention.2} parent=23 // pred_check_branch
        %144 = sbr.rel (%p142) target = $region28
      $region27: #{se_attention.2} parent=23 // pred_region
        %s145 = smul.u32 2, %s17
        %p146 = scmp.lt.s32.totalorder %s16, 1
        %s147 = scalar_select %p146, %s16, 1
        %p148 = scmp.lt.s32.totalorder %s145, 1
        %s149 = scalar_select %p148, %s145, 1
        %s150 = smul.addr %s147, 32
        %s151 = sadd.s32 %s149, %s150
        %s152 = smul.addr %s151, 8
        %s153 = scalar_lea.vmem %s0, %s152
        %s154 = smul.u32 2, %s17
      $region28: #{se_attention.2} parent=23 // pred_fallthru
        _
    $region24: #{se_attention.2} parent=5 // pred_fallthru
      _
    %p155 = scmp.le.s32.totalorder 1, %s9
    %p156 = scmp.lt.s32.totalorder %s9, 3
    %p157 = pnand %p155, %p156
    %p158 = pneg %p157
    // Predicated region
    $region29: #{se_attention.2} parent=5 // pred_check
      _
    $region30: #{se_attention.2} parent=5 // pred_check_branch
      %160 = sbr.rel (%p157) target = $region32
    $region31: #{se_attention.2} parent=5 // pred_region
      %s161 = ssub.s32 %s9, 1
      %s162 = smul.u32 2, %s19
      %p163 = scmp.lt.s32.totalorder %s18, 1
      %s164 = scalar_select %p163, %s18, 1
      %p165 = scmp.lt.s32.totalorder %s162, 1
      %s166 = scalar_select %p165, %s162, 1
      %s167 = smul.addr %s164, 32
      %s168 = sadd.s32 %s166, %s167
      %s169 = smul.addr %s168, 8
      %s170 = scalar_lea.vmem %s0, %s169
      %p171 = pneg %p49
      %p172 = pneg %p46
      %p173 = pneg %p70
      %p174 = pneg %p67
      %p175 = pneg %p91
      %p176 = pneg %p88
      %p177 = pneg %p117
      %p178 = pneg %p114
      %p179 = scmp.lt.s32.totalorder %s18, 1
      %s180 = scalar_select %p179, %s18, 1
      %s181 = smul.addr %s180, 16
      %s182 = smul.addr %s181, 8
      %s183 = scalar_lea.vmem %s3, %s182
      %s184 = smul.u32 2, %s19
      %p185 = scmp.lt.s32.totalorder %s18, 1
      %s186 = scalar_select %p185, %s18, 1
      %p187 = scmp.lt.s32.totalorder %s184, 1
      %s188 = scalar_select %p187, %s184, 1
      %s189 = smul.addr %s186, 32
      %s190 = sadd.s32 %s188, %s189
      %s191 = smul.addr %s190, 8
      %s192 = scalar_lea.vmem %s0, %s191
      %s193 = smul.u32 2, %s19
      %p194 = scmp.lt.s32.totalorder %s18, 1
      %s195 = scalar_select %p194, %s18, 1
      %s196 = smul.addr %s195, 16
      %s197 = smul.addr %s196, 8
      %s198 = scalar_lea.vmem %s3, %s197
      %p199 = scmp.eq.s32.totalorder %s19, 0
      // Predicated region
      $region33: #{se_attention.2} parent=31 // pred_check
        %p200 = pneg %p199
      $region34: #{se_attention.2} parent=31 // pred_check_branch
        %202 = sbr.rel (%p200) target = $region36
      $region35: #{se_attention.2} parent=31 // pred_region
        %203 = vst [vmem:[#allocation2] sm:$0xff] 0.0
        %204 = vst [vmem:[#allocation2 + $0x8] sm:$0xff] 0.0
        %205 = vst [vmem:[#allocation2 + $0x10] sm:$0xff] 0.0
        %206 = vst [vmem:[#allocation2 + $0x18] sm:$0xff] 0.0
        %207 = vst [vmem:[#allocation2 + $0x20] sm:$0xff] 0.0
        %208 = vst [vmem:[#allocation2 + $0x28] sm:$0xff] 0.0
        %209 = vst [vmem:[#allocation2 + $0x30] sm:$0xff] 0.0
        %210 = vst [vmem:[#allocation2 + $0x38] sm:$0xff] 0.0
        %211 = vst [vmem:[#allocation2 + $0x40] sm:$0xff] 0.0
        %212 = vst [vmem:[#allocation2 + $0x48] sm:$0xff] 0.0
        %213 = vst [vmem:[#allocation2 + $0x50] sm:$0xff] 0.0
        %214 = vst [vmem:[#allocation2 + $0x58] sm:$0xff] 0.0
        %215 = vst [vmem:[#allocation2 + $0x60] sm:$0xff] 0.0
        %216 = vst [vmem:[#allocation2 + $0x68] sm:$0xff] 0.0
        %217 = vst [vmem:[#allocation2 + $0x70] sm:$0xff] 0.0
        %218 = vst [vmem:[#allocation2 + $0x78] sm:$0xff] 0.0
      $region36: #{se_attention.2} parent=31 // pred_fallthru
        _
      %v219 = vld [vmem:[#allocation2] sm:$0xff]
      %v220 = vld [vmem:[#allocation2 + $0x8] sm:$0xff]
      %v221 = vld [vmem:[#allocation2 + $0x10] sm:$0xff]
      %v222 = vld [vmem:[#allocation2 + $0x18] sm:$0xff]
      %v223 = vld [vmem:[#allocation2 + $0x20] sm:$0xff]
      %v224 = vld [vmem:[#allocation2 + $0x28] sm:$0xff]
      %v225 = vld [vmem:[#allocation2 + $0x30] sm:$0xff]
      %v226 = vld [vmem:[#allocation2 + $0x38] sm:$0xff]
      %v227 = vld [vmem:[#allocation2 + $0x40] sm:$0xff]
      %v228 = vld [vmem:[#allocation2 + $0x48] sm:$0xff]
      %v229 = vld [vmem:[#allocation2 + $0x50] sm:$0xff]
      %v230 = vld [vmem:[#allocation2 + $0x58] sm:$0xff]
      %v231 = vld [vmem:[#allocation2 + $0x60] sm:$0xff]
      %v232 = vld [vmem:[#allocation2 + $0x68] sm:$0xff]
      %v233 = vld [vmem:[#allocation2 + $0x70] sm:$0xff]
      %v234 = vld [vmem:[#allocation2 + $0x78] sm:$0xff]
      %v235 = vld [vmem:[%s192] sm:$0xff]
      %v236 = vld [vmem:[%s192 + $0x10] sm:$0xff]
      %v237 = vld [vmem:[%s192 + $0x20] sm:$0xff]
      %v238 = vld [vmem:[%s192 + $0x30] sm:$0xff]
      %v239 = vld [vmem:[%s192 + $0x40] sm:$0xff]
      %v240 = vld [vmem:[%s192 + $0x50] sm:$0xff]
      %v241 = vld [vmem:[%s192 + $0x60] sm:$0xff]
      %v242 = vld [vmem:[%s192 + $0x70] sm:$0xff]
      %v243 = vld [vmem:[%s192 + $0x80] sm:$0xff]
      %v244 = vld [vmem:[%s192 + $0x90] sm:$0xff]
      %v245 = vld [vmem:[%s192 + $0xa0] sm:$0xff]
      %v246 = vld [vmem:[%s192 + $0xb0] sm:$0xff]
      %v247 = vld [vmem:[%s192 + $0xc0] sm:$0xff]
      %v248 = vld [vmem:[%s192 + $0xd0] sm:$0xff]
      %v249 = vld [vmem:[%s192 + $0xe0] sm:$0xff]
      %v250 = vld [vmem:[%s192 + $0xf0] sm:$0xff]
      %v251 = vadd.f32 %v219, %v235
      %v252 = vadd.f32 %v220, %v236
      %v253 = vadd.f32 %v221, %v237
      %v254 = vadd.f32 %v222, %v238
      %v255 = vadd.f32 %v223, %v239
      %v256 = vadd.f32 %v224, %v240
      %v257 = vadd.f32 %v225, %v241
      %v258 = vadd.f32 %v226, %v242
      %v259 = vadd.f32 %v227, %v243
      %v260 = vadd.f32 %v228, %v244
      %v261 = vadd.f32 %v229, %v245
      %v262 = vadd.f32 %v230, %v246
      %v263 = vadd.f32 %v231, %v247
      %v264 = vadd.f32 %v232, %v248
      %v265 = vadd.f32 %v233, %v249
      %v266 = vadd.f32 %v234, %v250
      %267 = vst [vmem:[#allocation2] sm:$0xff] %v251
      %268 = vst [vmem:[#allocation2 + $0x8] sm:$0xff] %v252
      %269 = vst [vmem:[#allocation2 + $0x10] sm:$0xff] %v253
      %270 = vst [vmem:[#allocation2 + $0x18] sm:$0xff] %v254
      %271 = vst [vmem:[#allocation2 + $0x20] sm:$0xff] %v255
      %272 = vst [vmem:[#allocation2 + $0x28] sm:$0xff] %v256
      %273 = vst [vmem:[#allocation2 + $0x30] sm:$0xff] %v257
      %274 = vst [vmem:[#allocation2 + $0x38] sm:$0xff] %v258
      %275 = vst [vmem:[#allocation2 + $0x40] sm:$0xff] %v259
      %276 = vst [vmem:[#allocation2 + $0x48] sm:$0xff] %v260
      %277 = vst [vmem:[#allocation2 + $0x50] sm:$0xff] %v261
      %278 = vst [vmem:[#allocation2 + $0x58] sm:$0xff] %v262
      %279 = vst [vmem:[#allocation2 + $0x60] sm:$0xff] %v263
      %280 = vst [vmem:[#allocation2 + $0x68] sm:$0xff] %v264
      %281 = vst [vmem:[#allocation2 + $0x70] sm:$0xff] %v265
      %282 = vst [vmem:[#allocation2 + $0x78] sm:$0xff] %v266
      %v283 = vld [vmem:[#allocation2] sm:$0xff]
      %v284 = vld [vmem:[#allocation2 + $0x8] sm:$0xff]
      %v285 = vld [vmem:[#allocation2 + $0x10] sm:$0xff]
      %v286 = vld [vmem:[#allocation2 + $0x18] sm:$0xff]
      %v287 = vld [vmem:[#allocation2 + $0x20] sm:$0xff]
      %v288 = vld [vmem:[#allocation2 + $0x28] sm:$0xff]
      %v289 = vld [vmem:[#allocation2 + $0x30] sm:$0xff]
      %v290 = vld [vmem:[#allocation2 + $0x38] sm:$0xff]
      %v291 = vld [vmem:[#allocation2 + $0x40] sm:$0xff]
      %v292 = vld [vmem:[#allocation2 + $0x48] sm:$0xff]
      %v293 = vld [vmem:[#allocation2 + $0x50] sm:$0xff]
      %v294 = vld [vmem:[#allocation2 + $0x58] sm:$0xff]
      %v295 = vld [vmem:[#allocation2 + $0x60] sm:$0xff]
      %v296 = vld [vmem:[#allocation2 + $0x68] sm:$0xff]
      %v297 = vld [vmem:[#allocation2 + $0x70] sm:$0xff]
      %v298 = vld [vmem:[#allocation2 + $0x78] sm:$0xff]
      %v299 = vld [vmem:[%s192 + $0x8] sm:$0xff]
      %v300 = vld [vmem:[%s192 + $0x18] sm:$0xff]
      %v301 = vld [vmem:[%s192 + $0x28] sm:$0xff]
      %v302 = vld [vmem:[%s192 + $0x38] sm:$0xff]
      %v303 = vld [vmem:[%s192 + $0x48] sm:$0xff]
      %v304 = vld [vmem:[%s192 + $0x58] sm:$0xff]
      %v305 = vld [vmem:[%s192 + $0x68] sm:$0xff]
      %v306 = vld [vmem:[%s192 + $0x78] sm:$0xff]
      %v307 = vld [vmem:[%s192 + $0x88] sm:$0xff]
      %v308 = vld [vmem:[%s192 + $0x98] sm:$0xff]
      %v309 = vld [vmem:[%s192 + $0xa8] sm:$0xff]
      %v310 = vld [vmem:[%s192 + $0xb8] sm:$0xff]
      %v311 = vld [vmem:[%s192 + $0xc8] sm:$0xff]
      %v312 = vld [vmem:[%s192 + $0xd8] sm:$0xff]
      %v313 = vld [vmem:[%s192 + $0xe8] sm:$0xff]
      %v314 = vld [vmem:[%s192 + $0xf8] sm:$0xff]
      %v315 = vadd.f32 %v283, %v299
      %v316 = vadd.f32 %v284, %v300
      %v317 = vadd.f32 %v285, %v301
      %v318 = vadd.f32 %v286, %v302
      %v319 = vadd.f32 %v287, %v303
      %v320 = vadd.f32 %v288, %v304
      %v321 = vadd.f32 %v289, %v305
      %v322 = vadd.f32 %v290, %v306
      %v323 = vadd.f32 %v291, %v307
      %v324 = vadd.f32 %v292, %v308
      %v325 = vadd.f32 %v293, %v309
      %v326 = vadd.f32 %v294, %v310
      %v327 = vadd.f32 %v295, %v311
      %v328 = vadd.f32 %v296, %v312
      %v329 = vadd.f32 %v297, %v313
      %v330 = vadd.f32 %v298, %v314
      %331 = vst [vmem:[#allocation2] sm:$0xff] %v315
      %332 = vst [vmem:[#allocation2 + $0x8] sm:$0xff] %v316
      %333 = vst [vmem:[#allocation2 + $0x10] sm:$0xff] %v317
      %334 = vst [vmem:[#allocation2 + $0x18] sm:$0xff] %v318
      %335 = vst [vmem:[#allocation2 + $0x20] sm:$0xff] %v319
      %336 = vst [vmem:[#allocation2 + $0x28] sm:$0xff] %v320
      %337 = vst [vmem:[#allocation2 + $0x30] sm:$0xff] %v321
      %338 = vst [vmem:[#allocation2 + $0x38] sm:$0xff] %v322
      %339 = vst [vmem:[#allocation2 + $0x40] sm:$0xff] %v323
      %340 = vst [vmem:[#allocation2 + $0x48] sm:$0xff] %v324
      %341 = vst [vmem:[#allocation2 + $0x50] sm:$0xff] %v325
      %342 = vst [vmem:[#allocation2 + $0x58] sm:$0xff] %v326
      %343 = vst [vmem:[#allocation2 + $0x60] sm:$0xff] %v327
      %344 = vst [vmem:[#allocation2 + $0x68] sm:$0xff] %v328
      %345 = vst [vmem:[#allocation2 + $0x70] sm:$0xff] %v329
      %346 = vst [vmem:[#allocation2 + $0x78] sm:$0xff] %v330
      // Predicated region
      $region37: #{se_attention.2} parent=31 // pred_check
        %p347 = pneg %p199
      $region38: #{se_attention.2} parent=31 // pred_check_branch
        %349 = sbr.rel (%p347) target = $region40
      $region39: #{se_attention.2} parent=31 // pred_region
        %v350 = vld [vmem:[#allocation2] sm:$0xff]
        %v351 = vld [vmem:[#allocation2 + $0x8] sm:$0xff]
        %v352 = vld [vmem:[#allocation2 + $0x10] sm:$0xff]
        %v353 = vld [vmem:[#allocation2 + $0x18] sm:$0xff]
        %v354 = vld [vmem:[#allocation2 + $0x20] sm:$0xff]
        %v355 = vld [vmem:[#allocation2 + $0x28] sm:$0xff]
        %v356 = vld [vmem:[#allocation2 + $0x30] sm:$0xff]
        %v357 = vld [vmem:[#allocation2 + $0x38] sm:$0xff]
        %v358 = vld [vmem:[#allocation2 + $0x40] sm:$0xff]
        %v359 = vld [vmem:[#allocation2 + $0x48] sm:$0xff]
        %v360 = vld [vmem:[#allocation2 + $0x50] sm:$0xff]
        %v361 = vld [vmem:[#allocation2 + $0x58] sm:$0xff]
        %v362 = vld [vmem:[#allocation2 + $0x60] sm:$0xff]
        %v363 = vld [vmem:[#allocation2 + $0x68] sm:$0xff]
        %v364 = vld [vmem:[#allocation2 + $0x70] sm:$0xff]
        %v365 = vld [vmem:[#allocation2 + $0x78] sm:$0xff]
        %366 = vadd.xlane.f32.xlu0 %v350
        %v367 = vpop.xlane.xlu0 %366
        %368 = vadd.xlane.f32.xlu0 %v351
        %v369 = vpop.xlane.xlu0 %368
        %370 = vadd.xlane.f32.xlu0 %v352
        %v371 = vpop.xlane.xlu0 %370
        %372 = vadd.xlane.f32.xlu0 %v353
        %v373 = vpop.xlane.xlu0 %372
        %374 = vadd.xlane.f32.xlu0 %v354
        %v375 = vpop.xlane.xlu0 %374
        %376 = vadd.xlane.f32.xlu0 %v355
        %v377 = vpop.xlane.xlu0 %376
        %378 = vadd.xlane.f32.xlu0 %v356
        %v379 = vpop.xlane.xlu0 %378
        %380 = vadd.xlane.f32.xlu0 %v357
        %v381 = vpop.xlane.xlu0 %380
        %382 = vadd.xlane.f32.xlu0 %v358
        %v383 = vpop.xlane.xlu0 %382
        %384 = vadd.xlane.f32.xlu0 %v359
        %v385 = vpop.xlane.xlu0 %384
        %386 = vadd.xlane.f32.xlu0 %v360
        %v387 = vpop.xlane.xlu0 %386
        %388 = vadd.xlane.f32.xlu0 %v361
        %v389 = vpop.xlane.xlu0 %388
        %390 = vadd.xlane.f32.xlu0 %v362
        %v391 = vpop.xlane.xlu0 %390
        %392 = vadd.xlane.f32.xlu0 %v363
        %v393 = vpop.xlane.xlu0 %392
        %394 = vadd.xlane.f32.xlu0 %v364
        %v395 = vpop.xlane.xlu0 %394
        %396 = vadd.xlane.f32.xlu0 %v365
        %v397 = vpop.xlane.xlu0 %396
        %v398 = vmul.f32 %v367, 0.00390625
        %v399 = vmul.f32 %v369, 0.00390625
        %v400 = vmul.f32 %v371, 0.00390625
        %v401 = vmul.f32 %v373, 0.00390625
        %v402 = vmul.f32 %v375, 0.00390625
        %v403 = vmul.f32 %v377, 0.00390625
        %v404 = vmul.f32 %v379, 0.00390625
        %v405 = vmul.f32 %v381, 0.00390625
        %v406 = vmul.f32 %v383, 0.00390625
        %v407 = vmul.f32 %v385, 0.00390625
        %v408 = vmul.f32 %v387, 0.00390625
        %v409 = vmul.f32 %v389, 0.00390625
        %v410 = vmul.f32 %v391, 0.00390625
        %v411 = vmul.f32 %v393, 0.00390625
        %v412 = vmul.f32 %v395, 0.00390625
        %v413 = vmul.f32 %v397, 0.00390625
        %v414 = vld [vmem:[%s1] sm:$0xff]
        %v415 = vld [vmem:[%s1 + $0x8] sm:$0xff]
        %v416 = vld [vmem:[%s1 + $0x10] sm:$0xff]
        %v417 = vld [vmem:[%s1 + $0x18] sm:$0xff]
        %418 = vmatpush.msra.mxu0 %v413
        %419 = vmatpush.msra.mxu0 %v412
        %420 = vmatpush.msra.mxu0 %v411
        %421 = vmatpush.msra.mxu0 %v410
        %422 = vmatpush.msra.mxu0 %v409
        %423 = vmatpush.msra.mxu0 %v408
        %424 = vmatpush.msra.mxu0 %v407
        %425 = vmatpush.msra.mxu0 %v406
        %426 = vmatpush.msra.mxu0 %v405
        %427 = vmatpush.msra.mxu0 %v404
        %428 = vmatpush.msra.mxu0 %v403
        %429 = vmatpush.msra.mxu0 %v402
        %430 = vmatpush.msra.mxu0 %v401
        %431 = vmatpush.msra.mxu0 %v400
        %432 = vmatpush.msra.mxu0 %v399
        %433 = vmatpush.msra.mxu0 %v398
        %434 = vmatmul.f32.gmra.mxu0 %v414
        %v435 = vpop.f32.mrf.mxu0
        %v436 = vadd.f32 0.0, %v435
        %437 = vmatmul.f32.gmra.mxu0 %v415
        %v438 = vpop.f32.mrf.mxu0
        %v439 = vadd.f32 0.0, %v438
        %440 = vmatmul.f32.gmra.mxu0 %v416
        %v441 = vpop.f32.mrf.mxu0
        %v442 = vadd.f32 0.0, %v441
        %443 = vmatmul.f32.gmra.mxu0 %v417
        %v444 = vpop.f32.mrf.mxu0
        %v445 = vadd.f32 0.0, %v444
        %446 = vdwg.mxu0
        %v447 = vmax.f32 %v436, 0.0
        %v448 = vmax.f32 %v439, 0.0
        %v449 = vmax.f32 %v442, 0.0
        %v450 = vmax.f32 %v445, 0.0
        %v451 = vld [vmem:[%s2] sm:$0xff]
        %v452 = vld [vmem:[%s2 + $0x8] sm:$0xff]
        %v453 = vld [vmem:[%s2 + $0x10] sm:$0xff]
        %v454 = vld [vmem:[%s2 + $0x18] sm:$0xff]
        %v455 = vld [vmem:[%s2 + $0x20] sm:$0xff]
        %v456 = vld [vmem:[%s2 + $0x28] sm:$0xff]
        %v457 = vld [vmem:[%s2 + $0x30] sm:$0xff]
        %v458 = vld [vmem:[%s2 + $0x38] sm:$0xff]
        %v459 = vld [vmem:[%s2 + $0x40] sm:$0xff]
        %v460 = vld [vmem:[%s2 + $0x48] sm:$0xff]
        %v461 = vld [vmem:[%s2 + $0x50] sm:$0xff]
        %v462 = vld [vmem:[%s2 + $0x58] sm:$0xff]
        %v463 = vld [vmem:[%s2 + $0x60] sm:$0xff]
        %v464 = vld [vmem:[%s2 + $0x68] sm:$0xff]
        %v465 = vld [vmem:[%s2 + $0x70] sm:$0xff]
        %v466 = vld [vmem:[%s2 + $0x78] sm:$0xff]
        %vm467 = vcmask 261120
        %v469 = vsel %vm467, %v451, 0
        %v472 = vsel %vm467, %v452, 0
        %v475 = vsel %vm467, %v453, 0
        %v478 = vsel %vm467, %v454, 0
        %v481 = vsel %vm467, %v455, 0
        %v484 = vsel %vm467, %v456, 0
        %v487 = vsel %vm467, %v457, 0
        %v490 = vsel %vm467, %v458, 0
        %v493 = vsel %vm467, %v459, 0
        %v496 = vsel %vm467, %v460, 0
        %v499 = vsel %vm467, %v461, 0
        %v502 = vsel %vm467, %v462, 0
        %v505 = vsel %vm467, %v463, 0
        %v508 = vsel %vm467, %v464, 0
        %v511 = vsel %vm467, %v465, 0
        %v514 = vsel %vm467, %v466, 0
        %516 = vmatpush.msra.mxu0 0.0
        %517 = vmatpush.msra.mxu0 0.0
        %518 = vmatpush.msra.mxu0 0.0
        %519 = vmatpush.msra.mxu0 0.0
        %520 = vmatpush.msra.mxu0 0.0
        %521 = vmatpush.msra.mxu0 0.0
        %522 = vmatpush.msra.mxu0 0.0
        %523 = vmatpush.msra.mxu0 0.0
        %524 = vmatpush.msra.mxu0 0.0
        %525 = vmatpush.msra.mxu0 0.0
        %526 = vmatpush.msra.mxu0 0.0
        %527 = vmatpush.msra.mxu0 0.0
        %528 = vmatpush.msra.mxu0 %v450
        %529 = vmatpush.msra.mxu0 %v449
        %530 = vmatpush.msra.mxu0 %v448
        %531 = vmatpush.msra.mxu0 %v447
        %532 = vmatmul.f32.gmra.mxu0 %v469
        %v533 = vpop.f32.mrf.mxu0
        %v534 = vadd.f32 0.0, %v533
        %535 = vmatmul.f32.gmra.mxu0 %v472
        %v536 = vpop.f32.mrf.mxu0
        %v537 = vadd.f32 0.0, %v536
        %538 = vmatmul.f32.gmra.mxu0 %v475
        %v539 = vpop.f32.mrf.mxu0
        %v540 = vadd.f32 0.0, %v539
        %541 = vmatmul.f32.gmra.mxu0 %v478
        %v542 = vpop.f32.mrf.mxu0
        %v543 = vadd.f32 0.0, %v542
        %544 = vmatmul.f32.gmra.mxu0 %v481
        %v545 = vpop.f32.mrf.mxu0
        %v546 = vadd.f32 0.0, %v545
        %547 = vmatmul.f32.gmra.mxu0 %v484
        %v548 = vpop.f32.mrf.mxu0
        %v549 = vadd.f32 0.0, %v548
        %550 = vmatmul.f32.gmra.mxu0 %v487
        %v551 = vpop.f32.mrf.mxu0
        %v552 = vadd.f32 0.0, %v551
        %553 = vmatmul.f32.gmra.mxu0 %v490
        %v554 = vpop.f32.mrf.mxu0
        %v555 = vadd.f32 0.0, %v554
        %556 = vmatmul.f32.gmra.mxu0 %v493
        %v557 = vpop.f32.mrf.mxu0
        %v558 = vadd.f32 0.0, %v557
        %559 = vmatmul.f32.gmra.mxu0 %v496
        %v560 = vpop.f32.mrf.mxu0
        %v561 = vadd.f32 0.0, %v560
        %562 = vmatmul.f32.gmra.mxu0 %v499
        %v563 = vpop.f32.mrf.mxu0
        %v564 = vadd.f32 0.0, %v563
        %565 = vmatmul.f32.gmra.mxu0 %v502
        %v566 = vpop.f32.mrf.mxu0
        %v567 = vadd.f32 0.0, %v566
        %568 = vmatmul.f32.gmra.mxu0 %v505
        %v569 = vpop.f32.mrf.mxu0
        %v570 = vadd.f32 0.0, %v569
        %571 = vmatmul.f32.gmra.mxu0 %v508
        %v572 = vpop.f32.mrf.mxu0
        %v573 = vadd.f32 0.0, %v572
        %574 = vmatmul.f32.gmra.mxu0 %v511
        %v575 = vpop.f32.mrf.mxu0
        %v576 = vadd.f32 0.0, %v575
        %577 = vmatmul.f32.gmra.mxu0 %v514
        %v578 = vpop.f32.mrf.mxu0
        %v579 = vadd.f32 0.0, %v578
        %580 = vdwg.mxu0
        %v581 = vxor.u32 %v534, 2147483648
        %v582 = vxor.u32 %v537, 2147483648
        %v583 = vxor.u32 %v540, 2147483648
        %v584 = vxor.u32 %v543, 2147483648
        %v585 = vxor.u32 %v546, 2147483648
        %v586 = vxor.u32 %v549, 2147483648
        %v587 = vxor.u32 %v552, 2147483648
        %v588 = vxor.u32 %v555, 2147483648
        %v589 = vxor.u32 %v558, 2147483648
        %v590 = vxor.u32 %v561, 2147483648
        %v591 = vxor.u32 %v564, 2147483648
        %v592 = vxor.u32 %v567, 2147483648
        %v593 = vxor.u32 %v570, 2147483648
        %v594 = vxor.u32 %v573, 2147483648
        %v595 = vxor.u32 %v576, 2147483648
        %v596 = vxor.u32 %v579, 2147483648
        %v597 = vmul.f32 %v581, 1.442695
        %v598 = vpow.pop %v597
        %v599 = vmul.f32 %v582, 1.442695
        %v600 = vpow.pop %v599
        %v601 = vmul.f32 %v583, 1.442695
        %v602 = vpow.pop %v601
        %v603 = vmul.f32 %v584, 1.442695
        %v604 = vpow.pop %v603
        %v605 = vmul.f32 %v585, 1.442695
        %v606 = vpow.pop %v605
        %v607 = vmul.f32 %v586, 1.442695
        %v608 = vpow.pop %v607
        %v609 = vmul.f32 %v587, 1.442695
        %v610 = vpow.pop %v609
        %v611 = vmul.f32 %v588, 1.442695
        %v612 = vpow.pop %v611
        %v613 = vmul.f32 %v589, 1.442695
        %v614 = vpow.pop %v613
        %v615 = vmul.f32 %v590, 1.442695
        %v616 = vpow.pop %v615
        %v617 = vmul.f32 %v591, 1.442695
        %v618 = vpow.pop %v617
        %v619 = vmul.f32 %v592, 1.442695
        %v620 = vpow.pop %v619
        %v621 = vmul.f32 %v593, 1.442695
        %v622 = vpow.pop %v621
        %v623 = vmul.f32 %v594, 1.442695
        %v624 = vpow.pop %v623
        %v625 = vmul.f32 %v595, 1.442695
        %v626 = vpow.pop %v625
        %v627 = vmul.f32 %v596, 1.442695
        %v628 = vpow.pop %v627
        %v629 = vadd.f32 %v598, 1.0
        %v630 = vadd.f32 %v600, 1.0
        %v631 = vadd.f32 %v602, 1.0
        %v632 = vadd.f32 %v604, 1.0
        %v633 = vadd.f32 %v606, 1.0
        %v634 = vadd.f32 %v608, 1.0
        %v635 = vadd.f32 %v610, 1.0
        %v636 = vadd.f32 %v612, 1.0
        %v637 = vadd.f32 %v614, 1.0
        %v638 = vadd.f32 %v616, 1.0
        %v639 = vadd.f32 %v618, 1.0
        %v640 = vadd.f32 %v620, 1.0
        %v641 = vadd.f32 %v622, 1.0
        %v642 = vadd.f32 %v624, 1.0
        %v643 = vadd.f32 %v626, 1.0
        %v644 = vadd.f32 %v628, 1.0
        %v645 = vrcp.pop %v629
        %v646 = vmul.f32 %v629, %v645
        %v647 = vsub.f32 1.0, %v646
        %v648 = vmul.f32 %v645, %v647
        %v649 = vadd.f32 %v645, %v648
        %vm650 = vweird.f32 %v629
        %vm651 = vweird.f32 %v645
        %vm652 = vmor %vm650, %vm651
        %v653 = vsel %vm652, %v645, %v649
        %v654 = vand.u32 2147483647, %v629
        %vm655 = vcmp.eq.f32.partialorder %v654, 8.507059e+37
        %v656 = vand.u32 %v629, 2147483648
        %v657 = vor.u32 1.1754944e-38, %v656
        %v658 = vsel %vm655, %v657, %v653
        %v659 = vmul.f32 1.0, %v658
        %v660 = vrcp.pop %v630
        %v661 = vmul.f32 %v630, %v660
        %v662 = vsub.f32 1.0, %v661
        %v663 = vmul.f32 %v660, %v662
        %v664 = vadd.f32 %v660, %v663
        %vm665 = vweird.f32 %v630
        %vm666 = vweird.f32 %v660
        %vm667 = vmor %vm665, %vm666
        %v668 = vsel %vm667, %v660, %v664
        %v669 = vand.u32 2147483647, %v630
        %vm670 = vcmp.eq.f32.partialorder %v669, 8.507059e+37
        %v671 = vand.u32 %v630, 2147483648
        %v672 = vor.u32 1.1754944e-38, %v671
        %v673 = vsel %vm670, %v672, %v668
        %v674 = vmul.f32 1.0, %v673
        %v675 = vrcp.pop %v631
        %v676 = vmul.f32 %v631, %v675
        %v677 = vsub.f32 1.0, %v676
        %v678 = vmul.f32 %v675, %v677
        %v679 = vadd.f32 %v675, %v678
        %vm680 = vweird.f32 %v631
        %vm681 = vweird.f32 %v675
        %vm682 = vmor %vm680, %vm681
        %v683 = vsel %vm682, %v675, %v679
        %v684 = vand.u32 2147483647, %v631
        %vm685 = vcmp.eq.f32.partialorder %v684, 8.507059e+37
        %v686 = vand.u32 %v631, 2147483648
        %v687 = vor.u32 1.1754944e-38, %v686
        %v688 = vsel %vm685, %v687, %v683
        %v689 = vmul.f32 1.0, %v688
        %v690 = vrcp.pop %v632
        %v691 = vmul.f32 %v632, %v690
        %v692 = vsub.f32 1.0, %v691
        %v693 = vmul.f32 %v690, %v692
        %v694 = vadd.f32 %v690, %v693
        %vm695 = vweird.f32 %v632
        %vm696 = vweird.f32 %v690
        %vm697 = vmor %vm695, %vm696
        %v698 = vsel %vm697, %v690, %v694
        %v699 = vand.u32 2147483647, %v632
        %vm700 = vcmp.eq.f32.partialorder %v699, 8.507059e+37
        %v701 = vand.u32 %v632, 2147483648
        %v702 = vor.u32 1.1754944e-38, %v701
        %v703 = vsel %vm700, %v702, %v698
        %v704 = vmul.f32 1.0, %v703
        %v705 = vrcp.pop %v633
        %v706 = vmul.f32 %v633, %v705
        %v707 = vsub.f32 1.0, %v706
        %v708 = vmul.f32 %v705, %v707
        %v709 = vadd.f32 %v705, %v708
        %vm710 = vweird.f32 %v633
        %vm711 = vweird.f32 %v705
        %vm712 = vmor %vm710, %vm711
        %v713 = vsel %vm712, %v705, %v709
        %v714 = vand.u32 2147483647, %v633
        %vm715 = vcmp.eq.f32.partialorder %v714, 8.507059e+37
        %v716 = vand.u32 %v633, 2147483648
        %v717 = vor.u32 1.1754944e-38, %v716
        %v718 = vsel %vm715, %v717, %v713
        %v719 = vmul.f32 1.0, %v718
        %v720 = vrcp.pop %v634
        %v721 = vmul.f32 %v634, %v720
        %v722 = vsub.f32 1.0, %v721
        %v723 = vmul.f32 %v720, %v722
        %v724 = vadd.f32 %v720, %v723
        %vm725 = vweird.f32 %v634
        %vm726 = vweird.f32 %v720
        %vm727 = vmor %vm725, %vm726
        %v728 = vsel %vm727, %v720, %v724
        %v729 = vand.u32 2147483647, %v634
        %vm730 = vcmp.eq.f32.partialorder %v729, 8.507059e+37
        %v731 = vand.u32 %v634, 2147483648
        %v732 = vor.u32 1.1754944e-38, %v731
        %v733 = vsel %vm730, %v732, %v728
        %v734 = vmul.f32 1.0, %v733
        %v735 = vrcp.pop %v635
        %v736 = vmul.f32 %v635, %v735
        %v737 = vsub.f32 1.0, %v736
        %v738 = vmul.f32 %v735, %v737
        %v739 = vadd.f32 %v735, %v738
        %vm740 = vweird.f32 %v635
        %vm741 = vweird.f32 %v735
        %vm742 = vmor %vm740, %vm741
        %v743 = vsel %vm742, %v735, %v739
        %v744 = vand.u32 2147483647, %v635
        %vm745 = vcmp.eq.f32.partialorder %v744, 8.507059e+37
        %v746 = vand.u32 %v635, 2147483648
        %v747 = vor.u32 1.1754944e-38, %v746
        %v748 = vsel %vm745, %v747, %v743
        %v749 = vmul.f32 1.0, %v748
        %v750 = vrcp.pop %v636
        %v751 = vmul.f32 %v636, %v750
        %v752 = vsub.f32 1.0, %v751
        %v753 = vmul.f32 %v750, %v752
        %v754 = vadd.f32 %v750, %v753
        %vm755 = vweird.f32 %v636
        %vm756 = vweird.f32 %v750
        %vm757 = vmor %vm755, %vm756
        %v758 = vsel %vm757, %v750, %v754
        %v759 = vand.u32 2147483647, %v636
        %vm760 = vcmp.eq.f32.partialorder %v759, 8.507059e+37
        %v761 = vand.u32 %v636, 2147483648
        %v762 = vor.u32 1.1754944e-38, %v761
        %v763 = vsel %vm760, %v762, %v758
        %v764 = vmul.f32 1.0, %v763
        %v765 = vrcp.pop %v637
        %v766 = vmul.f32 %v637, %v765
        %v767 = vsub.f32 1.0, %v766
        %v768 = vmul.f32 %v765, %v767
        %v769 = vadd.f32 %v765, %v768
        %vm770 = vweird.f32 %v637
        %vm771 = vweird.f32 %v765
        %vm772 = vmor %vm770, %vm771
        %v773 = vsel %vm772, %v765, %v769
        %v774 = vand.u32 2147483647, %v637
        %vm775 = vcmp.eq.f32.partialorder %v774, 8.507059e+37
        %v776 = vand.u32 %v637, 2147483648
        %v777 = vor.u32 1.1754944e-38, %v776
        %v778 = vsel %vm775, %v777, %v773
        %v779 = vmul.f32 1.0, %v778
        %v780 = vrcp.pop %v638
        %v781 = vmul.f32 %v638, %v780
        %v782 = vsub.f32 1.0, %v781
        %v783 = vmul.f32 %v780, %v782
        %v784 = vadd.f32 %v780, %v783
        %vm785 = vweird.f32 %v638
        %vm786 = vweird.f32 %v780
        %vm787 = vmor %vm785, %vm786
        %v788 = vsel %vm787, %v780, %v784
        %v789 = vand.u32 2147483647, %v638
        %vm790 = vcmp.eq.f32.partialorder %v789, 8.507059e+37
        %v791 = vand.u32 %v638, 2147483648
        %v792 = vor.u32 1.1754944e-38, %v791
        %v793 = vsel %vm790, %v792, %v788
        %v794 = vmul.f32 1.0, %v793
        %v795 = vrcp.pop %v639
        %v796 = vmul.f32 %v639, %v795
        %v797 = vsub.f32 1.0, %v796
        %v798 = vmul.f32 %v795, %v797
        %v799 = vadd.f32 %v795, %v798
        %vm800 = vweird.f32 %v639
        %vm801 = vweird.f32 %v795
        %vm802 = vmor %vm800, %vm801
        %v803 = vsel %vm802, %v795, %v799
        %v804 = vand.u32 2147483647, %v639
        %vm805 = vcmp.eq.f32.partialorder %v804, 8.507059e+37
        %v806 = vand.u32 %v639, 2147483648
        %v807 = vor.u32 1.1754944e-38, %v806
        %v808 = vsel %vm805, %v807, %v803
        %v809 = vmul.f32 1.0, %v808
        %v810 = vrcp.pop %v640
        %v811 = vmul.f32 %v640, %v810
        %v812 = vsub.f32 1.0, %v811
        %v813 = vmul.f32 %v810, %v812
        %v814 = vadd.f32 %v810, %v813
        %vm815 = vweird.f32 %v640
        %vm816 = vweird.f32 %v810
        %vm817 = vmor %vm815, %vm816
        %v818 = vsel %vm817, %v810, %v814
        %v819 = vand.u32 2147483647, %v640
        %vm820 = vcmp.eq.f32.partialorder %v819, 8.507059e+37
        %v821 = vand.u32 %v640, 2147483648
        %v822 = vor.u32 1.1754944e-38, %v821
        %v823 = vsel %vm820, %v822, %v818
        %v824 = vmul.f32 1.0, %v823
        %v825 = vrcp.pop %v641
        %v826 = vmul.f32 %v641, %v825
        %v827 = vsub.f32 1.0, %v826
        %v828 = vmul.f32 %v825, %v827
        %v829 = vadd.f32 %v825, %v828
        %vm830 = vweird.f32 %v641
        %vm831 = vweird.f32 %v825
        %vm832 = vmor %vm830, %vm831
        %v833 = vsel %vm832, %v825, %v829
        %v834 = vand.u32 2147483647, %v641
        %vm835 = vcmp.eq.f32.partialorder %v834, 8.507059e+37
        %v836 = vand.u32 %v641, 2147483648
        %v837 = vor.u32 1.1754944e-38, %v836
        %v838 = vsel %vm835, %v837, %v833
        %v839 = vmul.f32 1.0, %v838
        %v840 = vrcp.pop %v642
        %v841 = vmul.f32 %v642, %v840
        %v842 = vsub.f32 1.0, %v841
        %v843 = vmul.f32 %v840, %v842
        %v844 = vadd.f32 %v840, %v843
        %vm845 = vweird.f32 %v642
        %vm846 = vweird.f32 %v840
        %vm847 = vmor %vm845, %vm846
        %v848 = vsel %vm847, %v840, %v844
        %v849 = vand.u32 2147483647, %v642
        %vm850 = vcmp.eq.f32.partialorder %v849, 8.507059e+37
        %v851 = vand.u32 %v642, 2147483648
        %v852 = vor.u32 1.1754944e-38, %v851
        %v853 = vsel %vm850, %v852, %v848
        %v854 = vmul.f32 1.0, %v853
        %v855 = vrcp.pop %v643
        %v856 = vmul.f32 %v643, %v855
        %v857 = vsub.f32 1.0, %v856
        %v858 = vmul.f32 %v855, %v857
        %v859 = vadd.f32 %v855, %v858
        %vm860 = vweird.f32 %v643
        %vm861 = vweird.f32 %v855
        %vm862 = vmor %vm860, %vm861
        %v863 = vsel %vm862, %v855, %v859
        %v864 = vand.u32 2147483647, %v643
        %vm865 = vcmp.eq.f32.partialorder %v864, 8.507059e+37
        %v866 = vand.u32 %v643, 2147483648
        %v867 = vor.u32 1.1754944e-38, %v866
        %v868 = vsel %vm865, %v867, %v863
        %v869 = vmul.f32 1.0, %v868
        %v870 = vrcp.pop %v644
        %v871 = vmul.f32 %v644, %v870
        %v872 = vsub.f32 1.0, %v871
        %v873 = vmul.f32 %v870, %v872
        %v874 = vadd.f32 %v870, %v873
        %vm875 = vweird.f32 %v644
        %vm876 = vweird.f32 %v870
        %vm877 = vmor %vm875, %vm876
        %v878 = vsel %vm877, %v870, %v874
        %v879 = vand.u32 2147483647, %v644
        %vm880 = vcmp.eq.f32.partialorder %v879, 8.507059e+37
        %v881 = vand.u32 %v644, 2147483648
        %v882 = vor.u32 1.1754944e-38, %v881
        %v883 = vsel %vm880, %v882, %v878
        %v884 = vmul.f32 1.0, %v883
        %vm885 = vcmask 7168
        %886 = vst.msk [vmem:[%s198] sm:$0xff] %vm885, %v659
        %887 = vst.msk [vmem:[%s198 + $0x8] sm:$0xff] %vm885, %v674
        %888 = vst.msk [vmem:[%s198 + $0x10] sm:$0xff] %vm885, %v689
        %889 = vst.msk [vmem:[%s198 + $0x18] sm:$0xff] %vm885, %v704
        %890 = vst.msk [vmem:[%s198 + $0x20] sm:$0xff] %vm885, %v719
        %891 = vst.msk [vmem:[%s198 + $0x28] sm:$0xff] %vm885, %v734
        %892 = vst.msk [vmem:[%s198 + $0x30] sm:$0xff] %vm885, %v749
        %893 = vst.msk [vmem:[%s198 + $0x38] sm:$0xff] %vm885, %v764
        %894 = vst.msk [vmem:[%s198 + $0x40] sm:$0xff] %vm885, %v779
        %895 = vst.msk [vmem:[%s198 + $0x48] sm:$0xff] %vm885, %v794
        %896 = vst.msk [vmem:[%s198 + $0x50] sm:$0xff] %vm885, %v809
        %897 = vst.msk [vmem:[%s198 + $0x58] sm:$0xff] %vm885, %v824
        %898 = vst.msk [vmem:[%s198 + $0x60] sm:$0xff] %vm885, %v839
        %899 = vst.msk [vmem:[%s198 + $0x68] sm:$0xff] %vm885, %v854
        %900 = vst.msk [vmem:[%s198 + $0x70] sm:$0xff] %vm885, %v869
        %901 = vst.msk [vmem:[%s198 + $0x78] sm:$0xff] %vm885, %v884
      $region40: #{se_attention.2} parent=31 // pred_fallthru
        _
      %p902 = scmp.lt.s32.totalorder %s18, 1
      %s903 = scalar_select %p902, %s18, 1
      %s904 = smul.addr %s903, 16
      %s905 = smul.addr %s904, 8
      %s906 = scalar_lea.vmem %s3, %s905
      // Predicated region
      $region41: #{se_attention.2} parent=31 // pred_check
        %p907 = pneg %p114
      $region42: #{se_attention.2} parent=31 // pred_check_branch
        %909 = sbr.rel (%p907) target = $region44
      $region43: #{se_attention.2} parent=31 // pred_region
        _
      $region44: #{se_attention.2} parent=31 // pred_fallthru
        _
    $region32: #{se_attention.2} parent=5 // pred_fallthru
      _
    %p910 = scmp.le.s32.totalorder 2, %s9
    // Predicated region
    $region45: #{se_attention.2} parent=5 // pred_check
      %p911 = pneg %p910
    $region46: #{se_attention.2} parent=5 // pred_check_branch
      %913 = sbr.rel (%p911) target = $region48
    $region47: #{se_attention.2} parent=5 // pred_region
      %s914 = ssub.s32 %s9, 2
      // Predicated region
      $region49: #{se_attention.2} parent=47 // pred_check
        %p915 = pneg %p120
      $region50: #{se_attention.2} parent=47 // pred_check_branch
        %917 = sbr.rel (%p915) target = $region52
      $region51: #{se_attention.2} parent=47 // pred_region
        %p918 = scmp.lt.s32.totalorder %s20, 1
        %s919 = scalar_select %p918, %s20, 1
        %s920 = smul.addr %s919, 16
        %s921 = smul.addr %s920, 8
        %s922 = scalar_lea.vmem %s3, %s921
      $region52: #{se_attention.2} parent=47 // pred_fallthru
        _
    $region48: #{se_attention.2} parent=5 // pred_fallthru
      _
  $region6: #{se_attention.2} parent=0 // loop_footer
    %s13 = sadd.s32 1, %s9
  $region7: #{se_attention.2} parent=0 // loop_footer_branch
    %8 = sbr.rel target = $region3
  $region8: #{se_attention.2} parent=0 // loop_exit
    _

</llo_original>
